<compile_context>
chip_gen: v5e
topology: v5e:2x2
jax: 0.10.0
libtpu: 0.0.40
codegen_flags: <defaults>
</compile_context>

<pallas_src>
import functools

import numpy as np
import jax
import jax.numpy as jnp
from jax.experimental import pallas as pl
from jax.experimental.pallas import tpu as pltpu


# ------------------------------ kernels -----------------------------------


def _apply_invk(invk_ref, b, x, y, d, out_ref):
    """out[c] = d * (K[c,0]*x + K[c,1]*y + K[c,2]); out[3] = 1 (pure VPU FMAs)."""
    base = b * 9
    k00 = invk_ref[base + 0]
    k01 = invk_ref[base + 1]
    k02 = invk_ref[base + 2]
    k10 = invk_ref[base + 3]
    k11 = invk_ref[base + 4]
    k12 = invk_ref[base + 5]
    k20 = invk_ref[base + 6]
    k21 = invk_ref[base + 7]
    k22 = invk_ref[base + 8]
    out_ref[0, 0, :, :] = d * (k00 * x + (k01 * y + k02))
    out_ref[0, 1, :, :] = d * (k10 * x + (k11 * y + k12))
    out_ref[0, 2, :, :] = d * (k20 * x + (k21 * y + k22))
    out_ref[0, 3, :, :] = jnp.ones(d.shape, dtype=out_ref.dtype)


def _rows_kernel(invk_ref, depth_ref, out_ref):
    """Row-slab layout: depth (1,1,th,W), out (1,4,th,W)."""
    b = pl.program_id(0)
    r = pl.program_id(1)
    th = out_ref.shape[2]
    w = out_ref.shape[3]

    x = jax.lax.broadcasted_iota(jnp.int32, (th, w), 1).astype(jnp.float32)
    y = (jax.lax.broadcasted_iota(jnp.int32, (th, w), 0) + r * th).astype(
        jnp.float32
    )
    d = depth_ref[0, 0, :, :].astype(jnp.float32)
    _apply_invk(invk_ref, b, x, y, d, out_ref)


def _flat_kernel(invk_ref, depth_ref, out_ref, *, line_shift, x_shift, x_mask):
    """Flattened layout: depth (1,1,tr,L), out (1,4,tr,L) with L % 128 == 0.

    Global flat pixel index = (r*tr + row) * L + lane, with W | L and W a power
    of two, so y/x come from exact integer shifts/masks (no div, no f32 index).
    """
    b = pl.program_id(0)
    r = pl.program_id(1)
    tr = out_ref.shape[2]
    nl = out_ref.shape[3]

    row = jax.lax.broadcasted_iota(jnp.int32, (tr, nl), 0)
    lane = jax.lax.broadcasted_iota(jnp.int32, (tr, nl), 1)
    g = row + r * tr                                   # packed-line index
    y = ((g << line_shift) + (lane >> x_shift)).astype(jnp.float32)
    x = (lane & x_mask).astype(jnp.float32)
    d = depth_ref[0, 0, :, :].astype(jnp.float32)
    _apply_invk(invk_ref, b, x, y, d, out_ref)


# ----------------------------- tiling logic --------------------------------


def _hw_budget(depth_itemsize):
    """(per-plane element budget per grid step, vmem_limit_bytes), generation-aware."""
    vmem_bytes = None
    try:
        vmem_bytes = getattr(pltpu.get_tpu_info(), "vmem_capacity_bytes", None)
    except Exception:
        vmem_bytes = None
    if vmem_bytes is None:
        vmem_bytes = 64 << 20                       # conservative (v7x per-TC)

    if vmem_bytes >= (100 << 20):                   # v5e / v6e: 128 MiB physical
        vmem_limit = 96 << 20
    else:                                           # v7x: 64 MiB per TC
        vmem_limit = 48 << 20

    # Double-buffered footprint per plane element: 2 * (4 planes * 4 B + depth).
    per_elem = 2 * (16 + depth_itemsize)
    budget = min(1 << 20, int(vmem_limit * 0.75) // per_elem)
    return max(budget, 8 * 128), vmem_limit


def _pick_rows(n_rows, n_lanes, quantum, budget_elems, min_tiles):
    """Rows of the (n_rows, n_lanes) plane handled per grid step."""
    if n_rows <= quantum:
        return n_rows
    max_rows = min(
        n_rows,
        max(quantum, (budget_elems // max(n_lanes, 1)) // quantum * quantum),
    )
    if min_tiles > 1 and n_rows >= min_tiles * quantum:
        cap = max(quantum, (-(-n_rows // min_tiles)) // quantum * quantum)
        max_rows = min(max_rows, cap)
    if max_rows >= n_rows:
        return n_rows                               # whole plane per step
    # Prefer a divisor of n_rows (no masked tail block).
    for tr in range(max_rows, quantum - 1, -quantum):
        if n_rows % tr == 0:
            return tr
    return max_rows                                 # tail block is masked by Pallas


# ------------------------------- wrapper -----------------------------------


def backproject_depth(depth, inv_K):
    """depth: (B, 1, H, W) any float dtype; inv_K: (B, 4, 4) -> (B, 4, H*W) f32."""
    B, C, H, W = depth.shape
    assert C == 1, "depth must be (B, 1, H, W)"
    HW = H * W

    inv_k_flat = inv_K[:, :3, :3].astype(jnp.float32).reshape(-1)   # (B*9,) SMEM

    itemsize = jnp.dtype(depth.dtype).itemsize
    quantum = max(8, 32 // max(itemsize, 1))        # sublane quantum (f32:8, bf16:16)
    budget, vmem_limit = _hw_budget(itemsize)
    min_tiles = 2 if B == 1 else 1                  # keep both v7x TCs busy

    cost = pl.CostEstimate(
        flops=15 * B * HW,
        transcendentals=0,
        bytes_accessed=(16 + itemsize) * B * HW + 36 * B,
    )
    cparams = pltpu.CompilerParams(
        dimension_semantics=("parallel", "parallel"),
        vmem_limit_bytes=vmem_limit,
    )

    is_pow2_narrow_w = (W < 128) and (W & (W - 1) == 0) and (HW % 128 == 0)

    if (W % 128 != 0) and is_pow2_narrow_w:
        # ---- flat, lane-dense path: view the image plane as (R, L), L % 128 == 0 ----
        L = 128
        while L * 2 <= 2048 and HW % (L * 2) == 0:
            L *= 2
        R = HW // L
        tr = _pick_rows(R, L, quantum, budget, min_tiles)
        grid = (B, pl.cdiv(R, tr))

        kernel = functools.partial(
            _flat_kernel,
            line_shift=(L // W).bit_length() - 1,
            x_shift=W.bit_length() - 1,
            x_mask=W - 1,
        )
        out = pl.pallas_call(
            kernel,
            out_shape=jax.ShapeDtypeStruct((B, 4, R, L), jnp.float32),
            grid_spec=pltpu.PrefetchScalarGridSpec(
                num_scalar_prefetch=0,
                grid=grid,
                in_specs=[
                    pl.BlockSpec(memory_space=pltpu.MemorySpace.SMEM),
                    pl.BlockSpec((1, 1, tr, L), lambda b, r: (b, 0, r, 0)),
                ],
                out_specs=pl.BlockSpec((1, 4, tr, L), lambda b, r: (b, 0, r, 0)),
            ),
            compiler_params=cparams,
            cost_estimate=cost,
        )(inv_k_flat, depth.reshape(B, 1, R, L))
        return out.reshape(B, 4, HW)

    # ---- row-slab path: lane-dense when W % 128 == 0, masked-tail otherwise ----
    th = _pick_rows(H, W, quantum, budget, min_tiles)
    grid = (B, pl.cdiv(H, th))

    out = pl.pallas_call(
        _rows_kernel,
        out_shape=jax.ShapeDtypeStruct((B, 4, H, W), jnp.float32),
        grid_spec=pltpu.PrefetchScalarGridSpec(
            num_scalar_prefetch=0,
            grid=grid,
            in_specs=[
                pl.BlockSpec(memory_space=pltpu.MemorySpace.SMEM),
                pl.BlockSpec((1, 1, th, W), lambda b, r: (b, 0, r, 0)),
            ],
            out_specs=pl.BlockSpec((1, 4, th, W), lambda b, r: (b, 0, r, 0)),
        ),
        compiler_params=cparams,
        cost_estimate=cost,
    )(inv_k_flat, depth)
    return out.reshape(B, 4, HW)


# ----------------------------- reference -----------------------------------


def _reference(depth, inv_K):
    B, _, H, W = depth.shape
    xs, ys = np.meshgrid(range(W), range(H), indexing="xy")
    pix = np.stack([xs.reshape(-1), ys.reshape(-1)], 0).astype(np.float32)
    pix = np.broadcast_to(pix[None], (B, 2, H * W))
    ones = np.ones((B, 1, H * W), dtype=np.float32)
    pix = jnp.asarray(np.concatenate([pix, ones], axis=1))
    cam = jnp.matmul(
        inv_K[:, :3, :3].astype(jnp.float32), pix,
        precision=jax.lax.Precision.HIGHEST,
    )
    cam = depth.astype(jnp.float32).reshape(B, 1, -1) * cam
    ones = jnp.ones((B, 1, H * W), dtype=cam.dtype)
    return jnp.concatenate([cam, ones], axis=1)


if __name__ == "__main__":
    key = jax.random.PRNGKey(0)

    # Case 1: small power-of-two width -> flat lane-dense path.
    B, H, W = 2, 16, 16
    k_depth, k_invk, key = jax.random.split(key, 3)
    depth = jax.random.uniform(k_depth, (B, 1, H, W), dtype=jnp.float32) + 0.1
    inv_K = jnp.tile(jnp.eye(4, dtype=jnp.float32)[None], (B, 1, 1))
    inv_K = inv_K + 0.01 * jax.random.normal(k_invk, (B, 4, 4), dtype=jnp.float32)
    out = jax.block_until_ready(backproject_depth(depth, inv_K))
    np.testing.assert_allclose(
        np.asarray(out), np.asarray(_reference(depth, inv_K)), rtol=1e-5, atol=1e-5
    )

    # Case 2: width not a multiple of 128 and not a power of two -> row-slab path.
    B2, H2, W2 = 1, 12, 160
    k_depth2, k_invk2, key = jax.random.split(key, 3)
    depth2 = jax.random.uniform(k_depth2, (B2, 1, H2, W2), dtype=jnp.float32) + 0.1
    inv_K2 = jnp.tile(jnp.eye(4, dtype=jnp.float32)[None], (B2, 1, 1))
    inv_K2 = inv_K2 + 0.01 * jax.random.normal(k_invk2, (B2, 4, 4), dtype=jnp.float32)
    out2 = jax.block_until_ready(backproject_depth(depth2, inv_K2))
    np.testing.assert_allclose(
        np.asarray(out2), np.asarray(_reference(depth2, inv_K2)), rtol=1e-5, atol=1e-5
    )

    print("KERNEL_OK")
</pallas_src>

<mosaic_0001>
module attributes {stable_mosaic.version = 11 : i64} {
  func.func @_flat_kernel(%arg0: i32, %arg1: i32, %arg2: memref<18xf32, #tpu.memory_space<smem>>, %arg3: memref<1x1x1x256xf32, #tpu.memory_space<vmem>>, %arg4: memref<1x4x1x256xf32, #tpu.memory_space<vmem>>) attributes {dimension_semantics = [#tpu.dimension_semantics<parallel>, #tpu.dimension_semantics<parallel>], iteration_bounds = array<i64: 2, 1>, scalar_prefetch = 0 : i64, scratch_operands = 0 : i64, tpu.core_type = #tpu.core_type<tc>, window_params = [{transform_indices = @transform_0, window_bounds = array<i64: 18>}, {transform_indices = @transform_1, window_bounds = array<i64: 1, 1, 1, 256>}, {transform_indices = @transform_2, window_bounds = array<i64: 1, 4, 1, 256>}]} {
    %0 = tpu.iota {dimensions = array<i32: 0>} : vector<1x256xi32>
    %1 = tpu.iota {dimensions = array<i32: 1>} : vector<1x256xi32>
    %c1_i32 = arith.constant 1 : i32
    %2 = arith.muli %arg1, %c1_i32 : i32
    %3 = vector.broadcast %2 : i32 to vector<1x256xi32>
    %4 = arith.addi %0, %3 : vector<1x256xi32>
    %c4_i32 = arith.constant 4 : i32
    %5 = vector.broadcast %c4_i32 : i32 to vector<1x256xi32>
    %6 = arith.shli %4, %5 : vector<1x256xi32>
    %c4_i32_0 = arith.constant 4 : i32
    %7 = vector.broadcast %c4_i32_0 : i32 to vector<1x256xi32>
    %8 = arith.shrsi %1, %7 : vector<1x256xi32>
    %9 = arith.addi %6, %8 : vector<1x256xi32>
    %10 = arith.sitofp %9 : vector<1x256xi32> to vector<1x256xf32>
    %c15_i32 = arith.constant 15 : i32
    %11 = vector.broadcast %c15_i32 : i32 to vector<1x256xi32>
    %12 = arith.andi %1, %11 : vector<1x256xi32>
    %13 = arith.sitofp %12 : vector<1x256xi32> to vector<1x256xf32>
    %c0 = arith.constant 0 : index
    %c0_1 = arith.constant 0 : index
    %c0_2 = arith.constant 0 : index
    %c0_3 = arith.constant 0 : index
    %14 = vector.load %arg3[%c0, %c0_1, %c0_2, %c0_3] : memref<1x1x1x256xf32, #tpu.memory_space<vmem>>, vector<1x1x1x256xf32>
    %15 = vector.shape_cast %14 : vector<1x1x1x256xf32> to vector<1x256xf32>
    %c9_i32 = arith.constant 9 : i32
    %16 = arith.muli %arg0, %c9_i32 : i32
    %c0_i32 = arith.constant 0 : i32
    %17 = arith.addi %16, %c0_i32 : i32
    %18 = arith.index_cast %17 : i32 to index
    %19 = memref.load %arg2[%18] : memref<18xf32, #tpu.memory_space<smem>>
    %c1_i32_4 = arith.constant 1 : i32
    %20 = arith.addi %16, %c1_i32_4 : i32
    %21 = arith.index_cast %20 : i32 to index
    %22 = memref.load %arg2[%21] : memref<18xf32, #tpu.memory_space<smem>>
    %c2_i32 = arith.constant 2 : i32
    %23 = arith.addi %16, %c2_i32 : i32
    %24 = arith.index_cast %23 : i32 to index
    %25 = memref.load %arg2[%24] : memref<18xf32, #tpu.memory_space<smem>>
    %c3_i32 = arith.constant 3 : i32
    %26 = arith.addi %16, %c3_i32 : i32
    %27 = arith.index_cast %26 : i32 to index
    %28 = memref.load %arg2[%27] : memref<18xf32, #tpu.memory_space<smem>>
    %c4_i32_5 = arith.constant 4 : i32
    %29 = arith.addi %16, %c4_i32_5 : i32
    %30 = arith.index_cast %29 : i32 to index
    %31 = memref.load %arg2[%30] : memref<18xf32, #tpu.memory_space<smem>>
    %c5_i32 = arith.constant 5 : i32
    %32 = arith.addi %16, %c5_i32 : i32
    %33 = arith.index_cast %32 : i32 to index
    %34 = memref.load %arg2[%33] : memref<18xf32, #tpu.memory_space<smem>>
    %c6_i32 = arith.constant 6 : i32
    %35 = arith.addi %16, %c6_i32 : i32
    %36 = arith.index_cast %35 : i32 to index
    %37 = memref.load %arg2[%36] : memref<18xf32, #tpu.memory_space<smem>>
    %c7_i32 = arith.constant 7 : i32
    %38 = arith.addi %16, %c7_i32 : i32
    %39 = arith.index_cast %38 : i32 to index
    %40 = memref.load %arg2[%39] : memref<18xf32, #tpu.memory_space<smem>>
    %c8_i32 = arith.constant 8 : i32
    %41 = arith.addi %16, %c8_i32 : i32
    %42 = arith.index_cast %41 : i32 to index
    %43 = memref.load %arg2[%42] : memref<18xf32, #tpu.memory_space<smem>>
    %44 = vector.broadcast %19 : f32 to vector<1x256xf32>
    %45 = arith.mulf %44, %13 : vector<1x256xf32>
    %46 = vector.broadcast %22 : f32 to vector<1x256xf32>
    %47 = arith.mulf %46, %10 : vector<1x256xf32>
    %48 = vector.broadcast %25 : f32 to vector<1x256xf32>
    %49 = arith.addf %47, %48 : vector<1x256xf32>
    %50 = arith.addf %45, %49 : vector<1x256xf32>
    %51 = arith.mulf %15, %50 : vector<1x256xf32>
    %c0_6 = arith.constant 0 : index
    %c0_7 = arith.constant 0 : index
    %c0_8 = arith.constant 0 : index
    %c0_9 = arith.constant 0 : index
    %52 = vector.load %arg4[%c0_6, %c0_7, %c0_8, %c0_9] : memref<1x4x1x256xf32, #tpu.memory_space<vmem>>, vector<1x1x1x256xf32>
    %53 = vector.shape_cast %52 : vector<1x1x1x256xf32> to vector<1x256xf32>
    %54 = vector.shape_cast %51 : vector<1x256xf32> to vector<1x1x1x256xf32>
    tpu.vector_store %arg4[%c0_6, %c0_7, %c0_8, %c0_9], %54 {strides = array<i32>} : memref<1x4x1x256xf32, #tpu.memory_space<vmem>>, vector<1x1x1x256xf32>,
    %55 = vector.broadcast %28 : f32 to vector<1x256xf32>
    %56 = arith.mulf %55, %13 : vector<1x256xf32>
    %57 = vector.broadcast %31 : f32 to vector<1x256xf32>
    %58 = arith.mulf %57, %10 : vector<1x256xf32>
    %59 = vector.broadcast %34 : f32 to vector<1x256xf32>
    %60 = arith.addf %58, %59 : vector<1x256xf32>
    %61 = arith.addf %56, %60 : vector<1x256xf32>
    %62 = arith.mulf %15, %61 : vector<1x256xf32>
    %c0_10 = arith.constant 0 : index
    %c1 = arith.constant 1 : index
    %c0_11 = arith.constant 0 : index
    %c0_12 = arith.constant 0 : index
    %63 = vector.load %arg4[%c0_10, %c1, %c0_11, %c0_12] : memref<1x4x1x256xf32, #tpu.memory_space<vmem>>, vector<1x1x1x256xf32>
    %64 = vector.shape_cast %63 : vector<1x1x1x256xf32> to vector<1x256xf32>
    %65 = vector.shape_cast %62 : vector<1x256xf32> to vector<1x1x1x256xf32>
    tpu.vector_store %arg4[%c0_10, %c1, %c0_11, %c0_12], %65 {strides = array<i32>} : memref<1x4x1x256xf32, #tpu.memory_space<vmem>>, vector<1x1x1x256xf32>,
    %66 = vector.broadcast %37 : f32 to vector<1x256xf32>
    %67 = arith.mulf %66, %13 : vector<1x256xf32>
    %68 = vector.broadcast %40 : f32 to vector<1x256xf32>
    %69 = arith.mulf %68, %10 : vector<1x256xf32>
    %70 = vector.broadcast %43 : f32 to vector<1x256xf32>
    %71 = arith.addf %69, %70 : vector<1x256xf32>
    %72 = arith.addf %67, %71 : vector<1x256xf32>
    %73 = arith.mulf %15, %72 : vector<1x256xf32>
    %c0_13 = arith.constant 0 : index
    %c2 = arith.constant 2 : index
    %c0_14 = arith.constant 0 : index
    %c0_15 = arith.constant 0 : index
    %74 = vector.load %arg4[%c0_13, %c2, %c0_14, %c0_15] : memref<1x4x1x256xf32, #tpu.memory_space<vmem>>, vector<1x1x1x256xf32>
    %75 = vector.shape_cast %74 : vector<1x1x1x256xf32> to vector<1x256xf32>
    %76 = vector.shape_cast %73 : vector<1x256xf32> to vector<1x1x1x256xf32>
    tpu.vector_store %arg4[%c0_13, %c2, %c0_14, %c0_15], %76 {strides = array<i32>} : memref<1x4x1x256xf32, #tpu.memory_space<vmem>>, vector<1x1x1x256xf32>,
    %cst = arith.constant 1.000000e+00 : f32
    %77 = vector.broadcast %cst : f32 to vector<1x256xf32>
    %c0_16 = arith.constant 0 : index
    %c3 = arith.constant 3 : index
    %c0_17 = arith.constant 0 : index
    %c0_18 = arith.constant 0 : index
    %78 = vector.load %arg4[%c0_16, %c3, %c0_17, %c0_18] : memref<1x4x1x256xf32, #tpu.memory_space<vmem>>, vector<1x1x1x256xf32>
    %79 = vector.shape_cast %78 : vector<1x1x1x256xf32> to vector<1x256xf32>
    %80 = vector.shape_cast %77 : vector<1x256xf32> to vector<1x1x1x256xf32>
    tpu.vector_store %arg4[%c0_16, %c3, %c0_17, %c0_18], %80 {strides = array<i32>} : memref<1x4x1x256xf32, #tpu.memory_space<vmem>>, vector<1x1x1x256xf32>,
    return
  }
  func.func @transform_0(%arg0: i32, %arg1: i32) -> i32 {
    %c0_i32 = arith.constant 0 : i32
    %c0_i32_0 = arith.constant 0 : i32
    return %c0_i32 : i32
  }
  func.func @transform_1(%arg0: i32, %arg1: i32) -> (i32, i32, i32, i32) {
    %c0_i32 = arith.constant 0 : i32
    %c0_i32_0 = arith.constant 0 : i32
    %c0_i32_1 = arith.constant 0 : i32
    return %arg0, %c0_i32, %arg1, %c0_i32_0 : i32, i32, i32, i32
  }
  func.func @transform_2(%arg0: i32, %arg1: i32) -> (i32, i32, i32, i32) {
    %c0_i32 = arith.constant 0 : i32
    %c0_i32_0 = arith.constant 0 : i32
    %c0_i32_1 = arith.constant 0 : i32
    return %arg0, %c0_i32, %arg1, %c0_i32_0 : i32, i32, i32, i32
  }
}

</mosaic_0001>

<llo_original>
// kernel: tpu_custom_call.1
$region0: #{tpu_custom_call.1}
  #allocation0 [shape = 'u32[]', space=smem, size = 0x4, offset = 0x4, fixed_abs, tag = 'smem constant byte address 0x4 - core index']
  #allocation1 [shape = 'u32[72,128]{1,0:T(1,128)}', space=vmem, size = 0x9000, scoped, tag = 'internal scratch']
  %s0 = inlined_call_operand.hbm [shape: f32[18], index: 0, kind: input, shape index: {}]
  %s1 = inlined_call_operand.hbm [shape: f32[2,1,1,256], index: 1, kind: input, shape index: {}]
  %s2 = inlined_call_operand.hbm [shape: f32[2,4,1,256], index: 2, kind: output, shape index: {}]
  %s3 = sld [smem:[#allocation0]]
  $region49: #{tpu_custom_call.1} parent=0
    _
  %s5 = ssub.s32 1, %s3
  %s6 = scalar_select 0, %s5, %s3
  $region1: #{tpu_custom_call.1} parent=0
    #allocation2 [shape = 'u8[512]{0}', space=smem, size = 0x200, scoped, tag = 'input window, operand 0, single buffered']
    #allocation3 [shape = 's32[2]{0}', space=sflag, size = 0x8, scoped, tag = 'scoped memory for tpu_custom_call.1']
    #allocation4 [shape = 's32[2]{0}', space=sflag, size = 0x8, scoped, tag = 'scoped memory for tpu_custom_call.1']
    #allocation5 [shape = 's32[2]{0}', space=sflag, size = 0x8, scoped, tag = 'scoped memory for tpu_custom_call.1']
    #allocation6 [shape = 'u8[2048]{0}', space=vmem, size = 0x800, scoped, tag = 'input window, operand 1']
    #allocation7 [shape = 'u8[8192]{0}', space=vmem, size = 0x2000, scoped, tag = 'output window, operand 0']
    %7 = vsyncpa [#allocation5], 0
    %8 = vsyncpa [#allocation3], 0
    %s9 = scalar_lea.sflag [#allocation3], 1
    %10 = vsyncpa %s9, 0
    %11 = vsyncpa [#allocation4], 0
    %s12 = scalar_lea.sflag [#allocation4], 1
    %13 = vsyncpa %s12, 0
    loop: start=0, step=1, limit=4
    $region2: #{tpu_custom_call.1} parent=1 // loop_pre_header
      _
    $region3: #{tpu_custom_call.1} parent=1 // loop_header
      %s15 = sphi 0, %s19
      %p16 = scmp.ge.s32.totalorder %s15, 4
      %s22 = sphi 0, %s34
      %s23 = sphi 0, %s30
      %s24 = sphi 0, %s22
      %s25 = sphi 0, %s23
      %s26 = sphi 0, %s24
      %s27 = sphi 0, %s25
      %s35 = sphi 0, %s35
      %s37 = sphi 0, %s35
      %s38 = sphi 0, %s37
      %s52 = sphi 0, %s38
      %s60 = sphi 0, %s62
      %s63 = sphi 0, %s60
      %s64 = sphi 0, %s63
      %s80 = sphi 0, %s64
      %s88 = sphi 0, %s90
      %s91 = sphi 0, %s88
      %s92 = sphi 0, %s91
      %s108 = sphi 0, %s92
    $region4: #{tpu_custom_call.1} parent=1 // loop_header_branch
      %18 = sbr.rel (%p16) target = $region8
    $region5: #{tpu_custom_call.1} parent=1 // loop_body
      %s20 = ssub.s32 %s15, 1
      %s21 = ssub.s32 %s15, 2
      %s28 = sadd.s32 1, %s23
      %p29 = scmp.ge.s32.totalorder %s28, 1
      %s30 = scalar_select %p29, 0, %s28
      %s31 = sadd.s32 1, %s22
      %s32 = scalar_select %p29, %s31, %s22
      %p33 = scmp.ge.s32.totalorder %s32, 2
      %s34 = scalar_select %p33, 0, %s32
      %s36 = sadd.s32 %s35, 1
      %p39 = scmp.eq.s32.totalorder %s15, 1
      %p40 = scmp.ne.s32.totalorder %s35, %s37
      %p41 = scmp.eq.s32.totalorder %s15, 0
      %p42 = por %p40, %p41
      %p43 = scmp.ne.s32.totalorder %s35, %s37
      %p44 = scmp.eq.s32.totalorder %s20, 1
      %p45 = por %p43, %p44
      %p46 = scmp.ne.s32.totalorder %s37, %s38
      %p47 = scmp.eq.s32.totalorder %s20, 0
      %p48 = por %p46, %p47
      %p49 = scmp.ne.s32.totalorder %s37, %s38
      %p50 = scmp.eq.s32.totalorder %s21, 1
      %p51 = por %p49, %p50
      %p53 = scmp.ne.s32.totalorder %s38, %s52
      %p54 = scmp.eq.s32.totalorder %s21, 0
      %p55 = por %p53, %p54
      %s56 = ssub.s32 %s22, %s34
      %s57 = ssub.s32 %s23, %s30
      %s58 = sor.u32 %s56, %s57
      %p59 = scmp.eq.s32.totalorder %s58, 0
      %s61 = sadd.s32 %s60, 1
      %s62 = scalar_select %p59, %s60, %s61
      %p65 = pneg %p59
      %p66 = scmp.eq.s32.totalorder %s15, 1
      %p67 = por %p65, %p66
      %p68 = scmp.ne.s32.totalorder %s60, %s63
      %p69 = scmp.eq.s32.totalorder %s15, 0
      %p70 = por %p68, %p69
      %p71 = scmp.ne.s32.totalorder %s60, %s63
      %p72 = scmp.eq.s32.totalorder %s20, 1
      %p73 = por %p71, %p72
      %p74 = scmp.ne.s32.totalorder %s63, %s64
      %p75 = scmp.eq.s32.totalorder %s20, 0
      %p76 = por %p74, %p75
      %p77 = scmp.ne.s32.totalorder %s63, %s64
      %p78 = scmp.eq.s32.totalorder %s21, 1
      %p79 = por %p77, %p78
      %p81 = scmp.ne.s32.totalorder %s64, %s80
      %p82 = scmp.eq.s32.totalorder %s21, 0
      %p83 = por %p81, %p82
      %s84 = ssub.s32 %s22, %s34
      %s85 = ssub.s32 %s23, %s30
      %s86 = sor.u32 %s84, %s85
      %p87 = scmp.eq.s32.totalorder %s86, 0
      %s89 = sadd.s32 %s88, 1
      %s90 = scalar_select %p87, %s88, %s89
      %p93 = pneg %p87
      %p94 = scmp.eq.s32.totalorder %s15, 1
      %p95 = por %p93, %p94
      %p96 = scmp.ne.s32.totalorder %s88, %s91
      %p97 = scmp.eq.s32.totalorder %s15, 0
      %p98 = por %p96, %p97
      %p99 = scmp.ne.s32.totalorder %s88, %s91
      %p100 = scmp.eq.s32.totalorder %s20, 1
      %p101 = por %p99, %p100
      %p102 = scmp.ne.s32.totalorder %s91, %s92
      %p103 = scmp.eq.s32.totalorder %s20, 0
      %p104 = por %p102, %p103
      %p105 = scmp.ne.s32.totalorder %s91, %s92
      %p106 = scmp.eq.s32.totalorder %s21, 1
      %p107 = por %p105, %p106
      %p109 = scmp.ne.s32.totalorder %s92, %s108
      %p110 = scmp.eq.s32.totalorder %s21, 0
      %p111 = por %p109, %p110
      %p112 = scmp.le.s32.totalorder 1, %s15
      %p113 = scmp.lt.s32.totalorder %s15, 3
      %p114 = pnand %p112, %p113
      %p115 = pneg %p114
      // Predicated region
      $region9: #{tpu_custom_call.1} parent=5 // pred_check
        _
      $region10: #{tpu_custom_call.1} parent=5 // pred_check_branch
        %117 = sbr.rel (%p114) target = $region12
      $region11: #{tpu_custom_call.1} parent=5 // pred_region
        %s118 = ssub.s32 %s15, 1
        // Predicated region
        $region13: #{tpu_custom_call.1} parent=11 // pred_check
          %p119 = pneg %p48
        $region14: #{tpu_custom_call.1} parent=11 // pred_check_branch
          %121 = sbr.rel (%p119) target = $region16
        $region15: #{tpu_custom_call.1} parent=11 // pred_region
          %123 = vsyncadd [#allocation5], 0
          %s125 = sshll.u32 %s0, 4
          %s126 = int_to_ptr.hbm [resolvable:$true] %s125
          %128 = dma.hbm_to_smem %s126, 16, [#allocation2], [#allocation5]
        $region16: #{tpu_custom_call.1} parent=11 // pred_fallthru
          _
      $region12: #{tpu_custom_call.1} parent=5 // pred_fallthru
        _
      %p129 = scmp.lt.s32.totalorder %s15, 2
      // Predicated region
      $region17: #{tpu_custom_call.1} parent=5 // pred_check
        %p130 = pneg %p129
      $region18: #{tpu_custom_call.1} parent=5 // pred_check_branch
        %132 = sbr.rel (%p130) target = $region20
      $region19: #{tpu_custom_call.1} parent=5 // pred_region
        // Predicated region
        $region21: #{tpu_custom_call.1} parent=19 // pred_check
          %p133 = pneg %p70
        $region22: #{tpu_custom_call.1} parent=19 // pred_check_branch
          %135 = sbr.rel (%p133) target = $region24
        $region23: #{tpu_custom_call.1} parent=19 // pred_region
          %s136 = sand.u32 %s60, 1
          %s137 = scalar_lea.sflag [#allocation3], %s136
          %s138 = sand.u32 %s60, 1
          %s139 = smul.addr %s138, 2
          %s140 = scalar_lea.vmem [#allocation6], %s139
          %142 = vsyncadd %s137, 0
          %s143 = smul.addr %s23, 2
          %s144 = smul.addr %s22, 2
          %s145 = sadd.s32 %s143, %s144
          %s146 = scalar_lea.hbm %s1, %s145
          %s148 = sshll.u32 %s146, 4
          %s149 = int_to_ptr.hbm [resolvable:$true] %s148
          %s150 = sshll.u32 %s140, 4
          %s151 = int_to_ptr.vmem [resolvable:$true] %s150
          %153 = dma.hbm_to_vmem [thread:$0]  %s149, 32, %s151, %s137
        $region24: #{tpu_custom_call.1} parent=19 // pred_fallthru
          _
      $region20: #{tpu_custom_call.1} parent=5 // pred_fallthru
        _
      %p154 = scmp.le.s32.totalorder 1, %s15
      %p155 = scmp.lt.s32.totalorder %s15, 3
      %p156 = pnand %p154, %p155
      %p157 = pneg %p156
      // Predicated region
      $region25: #{tpu_custom_call.1} parent=5 // pred_check
        _
      $region26: #{tpu_custom_call.1} parent=5 // pred_check_branch
        %159 = sbr.rel (%p156) target = $region28
      $region27: #{tpu_custom_call.1} parent=5 // pred_region
        %s160 = ssub.s32 %s15, 1
        // Predicated region
        $region29: #{tpu_custom_call.1} parent=27 // pred_check
          %p161 = pneg %p48
        $region30: #{tpu_custom_call.1} parent=27 // pred_check_branch
          %163 = sbr.rel (%p161) target = $region32
        $region31: #{tpu_custom_call.1} parent=27 // pred_region
          %165 = dma.done [#allocation5], 16
        $region32: #{tpu_custom_call.1} parent=27 // pred_fallthru
          _
        %s166 = sand.u32 %s63, 1
        %s167 = scalar_lea.sflag [#allocation3], %s166
        %s168 = sand.u32 %s63, 1
        %s169 = smul.addr %s168, 2
        %s170 = scalar_lea.vmem [#allocation6], %s169
        // Predicated region
        $region33: #{tpu_custom_call.1} parent=27 // pred_check
          %p171 = pneg %p76
        $region34: #{tpu_custom_call.1} parent=27 // pred_check_branch
          %173 = sbr.rel (%p171) target = $region36
        $region35: #{tpu_custom_call.1} parent=27 // pred_region
          %175 = dma.done %s167, 32
        $region36: #{tpu_custom_call.1} parent=27 // pred_fallthru
          _
        %176 = sfence
        %p177 = pneg %p48
        %p178 = pneg %p45
        %s179 = sand.u32 %s63, 1
        %s180 = scalar_lea.sflag [#allocation3], %s179
        %s181 = sand.u32 %s63, 1
        %s182 = smul.addr %s181, 2
        %s183 = scalar_lea.vmem [#allocation6], %s182
        %p184 = pneg %p76
        %p185 = pneg %p73
        %p186 = pneg %p104
        %p187 = pneg %p101
        %s188 = sand.u32 %s91, 1
        %s189 = scalar_lea.sflag [#allocation4], %s188
        %s190 = sand.u32 %s91, 1
        %s191 = smul.addr %s190, 8
        %s192 = scalar_lea.vmem [#allocation7], %s191
        %v193 = vlaneseq
        %v194 = vshrl.u32 %v193, 7
        %v195 = vlaneseq
        %v196 = vand.u32 %v195, 127
        %v197 = vadd.s32 %v196, 128
        %v198 = vstv %s25
        %v199 = vadd.s32 %v194, %v198
        %v200 = vshll.u32 %v199, 4
        %v201 = vshra.s32 %v196, 4
        %v202 = vshra.s32 %v197, 4
        %v203 = vadd.s32 %v200, %v201
        %v204 = vadd.s32 %v200, %v202
        %v205 = vcvt.s32.f32 %v203
        %v206 = vcvt.s32.f32 %v204
        %v207 = vand.u32 %v196, 15
        %v208 = vand.u32 %v197, 15
        %v209 = vcvt.s32.f32 %v207
        %v210 = vcvt.s32.f32 %v208
        %v211 = vld [vmem:[%s170] sm:$0x3]
        %s212 = smul.u32 %s24, 9
        %s213 = sld [smem:[#allocation2 + %s212]]
        %s214 = sadd.s32 %s212, 1
        %s215 = sld [smem:[#allocation2 + %s214]]
        %s216 = sadd.s32 %s212, 2
        %s217 = sld [smem:[#allocation2 + %s216]]
        %s218 = sadd.s32 %s212, 3
        %s219 = sld [smem:[#allocation2 + %s218]]
        %s220 = sadd.s32 %s212, 4
        %s221 = sld [smem:[#allocation2 + %s220]]
        %s222 = sadd.s32 %s212, 5
        %s223 = sld [smem:[#allocation2 + %s222]]
        %s224 = sadd.s32 %s212, 6
        %s225 = sld [smem:[#allocation2 + %s224]]
        %s226 = sadd.s32 %s212, 7
        %s227 = sld [smem:[#allocation2 + %s226]]
        %s228 = sadd.s32 %s212, 8
        %s229 = sld [smem:[#allocation2 + %s228]]
        %v230 = vstv %s213
        %v231 = vmul.f32 %v230, %v209
        %v232 = vmul.f32 %v230, %v210
        %v233 = vstv %s215
        %v234 = vmul.f32 %v233, %v205
        %v235 = vmul.f32 %v233, %v206
        %v236 = vstv %s217
        %v237 = vadd.f32 %v234, %v236
        %v238 = vadd.f32 %v235, %v236
        %v239 = vadd.f32 %v231, %v237
        %v240 = vadd.f32 %v232, %v238
        %v243 = vrot.slane %v240, 7
        %vm244 = vcmask 1040384
        %v245 = vsel %vm244, %v239, %v243
        %v247 = vmul.f32 %v211, %v245
        %v248 = vlaneseq
        %vm249 = vcmp.ge.s32.totalorder %v248, 0
        %vm250 = vcmp.lt.s32.totalorder %v248, 256
        %vm251 = vmand %vm249, %vm250
        %252 = vst.msk [vmem:[%s192] sm:$0x3] %vm251, %v247
        %v253 = vstv %s219
        %v254 = vmul.f32 %v253, %v209
        %v255 = vmul.f32 %v253, %v210
        %v256 = vstv %s221
        %v257 = vmul.f32 %v256, %v205
        %v258 = vmul.f32 %v256, %v206
        %v259 = vstv %s223
        %v260 = vadd.f32 %v257, %v259
        %v261 = vadd.f32 %v258, %v259
        %v262 = vadd.f32 %v254, %v260
        %v263 = vadd.f32 %v255, %v261
        %v266 = vrot.slane %v263, 7
        %v267 = vsel %vm244, %v262, %v266
        %v269 = vmul.f32 %v211, %v267
        %s270 = scalar_lea.vmem %s192, 2 [#allocation7]
        %271 = vst.msk [vmem:[%s270] sm:$0x3] %vm251, %v269
        %v272 = vstv %s225
        %v273 = vmul.f32 %v272, %v209
        %v274 = vmul.f32 %v272, %v210
        %v275 = vstv %s227
        %v276 = vmul.f32 %v275, %v205
        %v277 = vmul.f32 %v275, %v206
        %v278 = vstv %s229
        %v279 = vadd.f32 %v276, %v278
        %v280 = vadd.f32 %v277, %v278
        %v281 = vadd.f32 %v273, %v279
        %v282 = vadd.f32 %v274, %v280
        %v285 = vrot.slane %v282, 7
        %v286 = vsel %vm244, %v281, %v285
        %v288 = vmul.f32 %v211, %v286
        %s289 = scalar_lea.vmem %s192, 4 [#allocation7]
        %290 = vst.msk [vmem:[%s289] sm:$0x3] %vm251, %v288
        %s291 = scalar_lea.vmem %s192, 6 [#allocation7]
        %292 = vst.msk [vmem:[%s291] sm:$0x3] %vm251, 1.0
        %s293 = sand.u32 %s91, 1
        %s294 = scalar_lea.sflag [#allocation4], %s293
        %s295 = sand.u32 %s91, 1
        %s296 = smul.addr %s295, 8
        %s297 = scalar_lea.vmem [#allocation7], %s296
        // Predicated region
        $region37: #{tpu_custom_call.1} parent=27 // pred_check
          %p298 = pneg %p101
        $region38: #{tpu_custom_call.1} parent=27 // pred_check_branch
          %300 = sbr.rel (%p298) target = $region40
        $region39: #{tpu_custom_call.1} parent=27 // pred_region
          %302 = vsyncadd %s294, 0
          %s303 = smul.addr %s25, 2
          %s304 = smul.addr %s24, 8
          %s305 = sadd.s32 %s303, %s304
          %s306 = scalar_lea.hbm %s2, %s305
          %s307 = sshll.u32 %s297, 4
          %s308 = int_to_ptr.vmem [resolvable:$true] %s307
          %s309 = sshll.u32 %s306, 4
          %s310 = int_to_ptr.hbm [resolvable:$true] %s309
          %315 = dma.vmem_to_hbm [thread:$0]  %s308, 128, %s310, %s294, 32, 32, 2
        $region40: #{tpu_custom_call.1} parent=27 // pred_fallthru
          _
      $region28: #{tpu_custom_call.1} parent=5 // pred_fallthru
        _
      %p316 = scmp.le.s32.totalorder 2, %s15
      // Predicated region
      $region41: #{tpu_custom_call.1} parent=5 // pred_check
        %p317 = pneg %p316
      $region42: #{tpu_custom_call.1} parent=5 // pred_check_branch
        %319 = sbr.rel (%p317) target = $region44
      $region43: #{tpu_custom_call.1} parent=5 // pred_region
        %s320 = ssub.s32 %s15, 2
        // Predicated region
        $region45: #{tpu_custom_call.1} parent=43 // pred_check
          %p321 = pneg %p107
        $region46: #{tpu_custom_call.1} parent=43 // pred_check_branch
          %323 = sbr.rel (%p321) target = $region48
        $region47: #{tpu_custom_call.1} parent=43 // pred_region
          %s324 = sand.u32 %s92, 1
          %s325 = scalar_lea.sflag [#allocation4], %s324
          %s326 = sand.u32 %s92, 1
          %s327 = smul.addr %s326, 8
          %s328 = scalar_lea.vmem [#allocation7], %s327
          %330 = dma.done %s325, 128
        $region48: #{tpu_custom_call.1} parent=43 // pred_fallthru
          _
      $region44: #{tpu_custom_call.1} parent=5 // pred_fallthru
        _
    $region6: #{tpu_custom_call.1} parent=1 // loop_footer
      %s19 = sadd.s32 1, %s15
    $region7: #{tpu_custom_call.1} parent=1 // loop_footer_branch
      %14 = sbr.rel target = $region3
    $region8: #{tpu_custom_call.1} parent=1 // loop_exit
      _
    %331 = vsyncpa [#allocation3], 1
    %s332 = scalar_lea.sflag [#allocation3], 1
    %333 = vsyncpa %s332, 1
    %334 = vsyncpa [#allocation4], 1
    %s335 = scalar_lea.sflag [#allocation4], 1
    %336 = vsyncpa %s335, 1
    %337 = vsyncpa [#allocation5], 1
    %s338 = scalar_lea.sflag [#allocation5], 1
    %339 = vsyncpa %s338, 1

</llo_original>
